<compile_context>
chip_gen: v7x
topology: tpu7x:2x2x1
jax: 0.10.0
libtpu: 0.0.40
codegen_flags: <defaults>
</compile_context>

<pallas_src>
import jax
import jax.numpy as jnp
import numpy as np
from jax.experimental import pallas as pl
from jax.experimental.pallas import tpu as pltpu

# ---- Model hyper-parameters (from the PyTorch module __init__) ----
CIN, COUT, KH, KW = 3, 10, 4, 2
PH, PW = 3, 1
SH, SW = 2, 2
FC_IN, FC_OUT = 300, 10

# Input spatial size implied by FC_IN = COUT * Ho * Wo = 300  ->  H = W = 8
H_IN, W_IN = 8, 8
HO = (H_IN + 2 * PH - KH) // SH + 1          # 6
WO = (W_IN + 2 * PW - KW) // SW + 1          # 5
P = HO * WO                                  # 30 output positions per image
assert COUT * P == FC_IN

# ---- Kernel-side padded (sublane/lane friendly) sizes ----
X_FEAT = CIN * H_IN * W_IN                   # 192 raw input features / image
M_PAD = 8                                    # batch rows -> one sublane tile
K_PAD = 256                                  # 2*128; col 192 = ones column (biases)
N1 = P * COUT                                # 300 conv outputs in (p, c) order
N1_PAD = 384                                 # 3*128; col 300 = ones column (FC bias)
N2_PAD = 128                                 # FC_OUT (=10) padded to one lane tile


def _fused_kernel(x_ref, w1_ref, w2_ref, o_ref):
    """Whole forward pass: two MXU matmuls + EUP sigmoid.

    x_ref : (8, 256)   flattened NCHW input + ones column (feeds both biases)
    w1_ref: (256, 384) im2col-selection o block-diagonal conv weight + bias row
    w2_ref: (384, 128) permuted FC weight + FC-bias row
    o_ref : (8, 128)   sigmoid(FC(conv(x)));  valid region is [:B, :10]
    """
    h = jnp.dot(x_ref[...], w1_ref[...], preferred_element_type=jnp.float32)
    y = jnp.dot(h, w2_ref[...], preferred_element_type=jnp.float32)
    o_ref[...] = jax.nn.sigmoid(y)


def prepare_params(params):
    """One-time weight preparation (init time, off the per-call critical path).

    Folds (a) zero padding, (b) im2col patch selection, (c) the block-diagonal
    conv-as-matmul expansion, (d) the PyTorch channel-major flatten permutation
    and (e) both biases into two dense weight matrices.
    """
    w_conv, b_conv, w_fc, b_fc = (np.asarray(p, np.float32) for p in params)

    # --- W1: input pixel (cin, ih, iw) -> conv output column (p, cout) -------
    w1 = np.zeros((K_PAD, N1_PAD), np.float32)
    for oh in range(HO):
        for ow in range(WO):
            p = oh * WO + ow
            for kh in range(KH):
                ih = oh * SH - PH + kh
                if ih < 0 or ih >= H_IN:
                    continue                      # falls in the zero padding
                for kw in range(KW):
                    iw = ow * SW - PW + kw
                    if iw < 0 or iw >= W_IN:
                        continue
                    for cin in range(CIN):
                        i = cin * H_IN * W_IN + ih * W_IN + iw
                        for c in range(COUT):
                            w1[i, p * COUT + c] = w_conv[c, cin, kh, kw]
            for c in range(COUT):                 # conv bias via ones column
                w1[X_FEAT, p * COUT + c] = b_conv[c]
    w1[X_FEAT, N1] = 1.0                          # propagate ones -> FC bias row

    # --- W2: FC weight, columns permuted from (c, p) flatten order to (p, c) -
    w2 = np.zeros((N1_PAD, N2_PAD), np.float32)
    w2core = w_fc.reshape(FC_OUT, COUT, P).transpose(2, 1, 0).reshape(N1, FC_OUT)
    w2[:N1, :FC_OUT] = w2core
    w2[N1, :FC_OUT] = b_fc                        # FC bias row
    return jnp.asarray(w1), jnp.asarray(w2)


@jax.jit
def model_forward(x, w1, w2):
    """Equivalent of Model.forward: Conv2d -> flatten -> Linear -> sigmoid."""
    B = x.shape[0]
    assert B <= M_PAD

    xflat = x.reshape(B, X_FEAT).astype(jnp.float32)       # free NCHW flatten
    xin = jnp.zeros((M_PAD, K_PAD), jnp.float32)
    xin = xin.at[:B, :X_FEAT].set(xflat)
    xin = xin.at[:, X_FEAT].set(1.0)                        # ones column (biases)

    out = pl.pallas_call(
        _fused_kernel,
        out_shape=jax.ShapeDtypeStruct((M_PAD, N2_PAD), jnp.float32),
        in_specs=[pl.BlockSpec(memory_space=pltpu.MemorySpace.VMEM)] * 3,
        out_specs=pl.BlockSpec(memory_space=pltpu.MemorySpace.VMEM),
    )(xin, w1, w2)
    return out[:B, :FC_OUT]


def reference_forward(x, params):
    """Plain-JAX reference matching PyTorch semantics, for verification."""
    w_conv, b_conv, w_fc, b_fc = params
    B = x.shape[0]
    conv = jax.lax.conv_general_dilated(
        x, w_conv, window_strides=(SH, SW), padding=((PH, PH), (PW, PW)),
        dimension_numbers=("NCHW", "OIHW", "NCHW"))
    conv = conv + b_conv[None, :, None, None]
    flat = conv.reshape(B, -1)
    return jax.nn.sigmoid(flat @ w_fc.T + b_fc)


if __name__ == "__main__":
    key = jax.random.PRNGKey(0)
    k1, k2, k3, k4, kx = jax.random.split(key, 5)

    # Deterministic parameter init (PyTorch-style uniform(-1/sqrt(fan_in), ...)).
    fan_conv = CIN * KH * KW
    w_conv = jax.random.uniform(k1, (COUT, CIN, KH, KW), jnp.float32,
                                minval=-1.0, maxval=1.0) / jnp.sqrt(fan_conv)
    b_conv = jax.random.uniform(k2, (COUT,), jnp.float32,
                                minval=-1.0, maxval=1.0) / jnp.sqrt(fan_conv)
    w_fc = jax.random.uniform(k3, (FC_OUT, FC_IN), jnp.float32,
                              minval=-1.0, maxval=1.0) / jnp.sqrt(FC_IN)
    b_fc = jax.random.uniform(k4, (FC_OUT,), jnp.float32,
                              minval=-1.0, maxval=1.0) / jnp.sqrt(FC_IN)
    params = (w_conv, b_conv, w_fc, b_fc)

    # One-time weight prep (im2col + block-diagonal conv weight, permuted FC
    # weight, biases folded).
    w1, w2 = jax.block_until_ready(prepare_params(params))

    # x: (B=2, C=3, H=8, W=8) -> conv out (2, 10, 6, 5) -> flatten 300 (matches FC).
    x = jax.random.normal(kx, (2, 3, 8, 8), dtype=jnp.float32)

    out = jax.block_until_ready(model_forward(x, w1, w2))
    ref = jax.block_until_ready(reference_forward(x, params))

    assert out.shape == (2, 10), out.shape
    np.testing.assert_allclose(np.asarray(out), np.asarray(ref), rtol=1e-5, atol=1e-5)
    print("KERNEL_OK")
</pallas_src>

<mosaic_0001>
module attributes {stable_mosaic.version = 11 : i64} {
  func.func @_fused_kernel(%arg0: memref<8x256xf32, #tpu.memory_space<vmem>>, %arg1: memref<256x384xf32, #tpu.memory_space<vmem>>, %arg2: memref<384x128xf32, #tpu.memory_space<vmem>>, %arg3: memref<8x128xf32, #tpu.memory_space<vmem>>) attributes {dimension_semantics = [], scalar_prefetch = 0 : i64, scratch_operands = 0 : i64, tpu.core_type = #tpu.core_type<tc>} {
    %c0 = arith.constant 0 : index
    %c0_0 = arith.constant 0 : index
    %0 = vector.load %arg0[%c0, %c0_0] : memref<8x256xf32, #tpu.memory_space<vmem>>, vector<8x256xf32>
    %c0_1 = arith.constant 0 : index
    %c0_2 = arith.constant 0 : index
    %1 = vector.load %arg1[%c0_1, %c0_2] : memref<256x384xf32, #tpu.memory_space<vmem>>, vector<256x384xf32>
    %cst = arith.constant dense<0.000000e+00> : vector<8x384xf32>
    %2 = tpu.matmul %0, %1, %cst {dimension_numbers = #tpu.dot_dimension_numbers<[1], [0], [0], [1], [0, 0, 1, 1], [], []>} : vector<8x256xf32>, vector<256x384xf32>, vector<8x384xf32> -> vector<8x384xf32>
    %c0_3 = arith.constant 0 : index
    %c0_4 = arith.constant 0 : index
    %3 = vector.load %arg2[%c0_3, %c0_4] : memref<384x128xf32, #tpu.memory_space<vmem>>, vector<384x128xf32>
    %cst_5 = arith.constant dense<0.000000e+00> : vector<8x128xf32>
    %4 = tpu.matmul %2, %3, %cst_5 {dimension_numbers = #tpu.dot_dimension_numbers<[1], [0], [0], [1], [0, 0, 1, 1], [], []>} : vector<8x384xf32>, vector<384x128xf32>, vector<8x128xf32> -> vector<8x128xf32>
    %5 = arith.negf %4 : vector<8x128xf32>
    %6 = math.exp %5 : vector<8x128xf32>
    %cst_6 = arith.constant 1.000000e+00 : f32
    %7 = vector.broadcast %cst_6 : f32 to vector<8x128xf32>
    %8 = arith.addf %7, %6 : vector<8x128xf32>
    %9 = arith.divf %7, %8 : vector<8x128xf32>
    %c0_7 = arith.constant 0 : index
    %c0_8 = arith.constant 0 : index
    %10 = vector.load %arg3[%c0_7, %c0_8] : memref<8x128xf32, #tpu.memory_space<vmem>>, vector<8x128xf32>
    tpu.vector_store %arg3[%c0_7, %c0_8], %9 {strides = array<i32>} : memref<8x128xf32, #tpu.memory_space<vmem>>, vector<8x128xf32>,
    return
  }
}

</mosaic_0001>

<llo_original>
// kernel: model_forward.1
$region0: #{model_forward.1}
  #allocation0 [shape = 'u32[]', space=smem, size = 0x4, offset = 0x4, fixed_abs, tag = 'smem constant byte address 0x4 - core index']
  #allocation1 [shape = 'u32[144,128]{1,0:T(1,128)}', space=vmem, size = 0x12000, scoped, tag = 'internal scratch']
  %s0 = inlined_call_operand.vmem [shape: f32[8,256], index: 0, kind: input, shape index: {}]
  %s1 = inlined_call_operand.hbm [shape: f32[256,384], index: 1, kind: input, shape index: {}]
  %s2 = inlined_call_operand.hbm [shape: f32[384,128], index: 2, kind: input, shape index: {}]
  %s3 = inlined_call_operand.vmem [shape: f32[8,128], index: 3, kind: output, shape index: {}]
  %s4 = sld [smem:[#allocation0]]
  $region30: #{model_forward.1} parent=0
    _
  %s6 = ssub.s32 1, %s4
  %s7 = scalar_select 0, %s6, %s4
  $region1: #{model_forward.1} parent=0
    #allocation2 [shape = 'u8[393216]{0}', space=vmem, size = 0x60000, scoped, tag = 'input window, operand 1, single buffered']
    #allocation3 [shape = 's32[1]{0}', space=sflag, size = 0x4, scoped, tag = 'scoped memory for model_forward.1']
    #allocation4 [shape = 'u8[196608]{0}', space=vmem, size = 0x30000, scoped, tag = 'input window, operand 2, single buffered']
    #allocation5 [shape = 's32[1]{0}', space=sflag, size = 0x4, scoped, tag = 'scoped memory for model_forward.1']
    %8 = vsyncpa [#allocation3], 0
    %9 = vsyncpa [#allocation5], 0
    // Predicated region
    $region2: #{model_forward.1} parent=1 // pred_check
      _
    $region3: #{model_forward.1} parent=1 // pred_check_branch
      %11 = sbr.rel (0) target = $region5
    $region4: #{model_forward.1} parent=1 // pred_region
      _
    $region5: #{model_forward.1} parent=1 // pred_fallthru
      _
    // Predicated region
    $region6: #{model_forward.1} parent=1 // pred_check
      _
    $region7: #{model_forward.1} parent=1 // pred_check_branch
      %13 = sbr.rel (0) target = $region9
    $region8: #{model_forward.1} parent=1 // pred_region
      %s15 = ssub.s32 12288, 12288
      %16 = vsyncadd [#allocation3], %s15
      %s17 = sshll.u32 [#allocation2], 4
      %s18 = int_to_ptr.vmem [resolvable:$true] %s17
      %23 = dma.hbm_to_vmem [thread:$0]  %s1, 12288, %s18, [#allocation3], 384, 384, 24
    $region9: #{model_forward.1} parent=1 // pred_fallthru
      _
    // Predicated region
    $region10: #{model_forward.1} parent=1 // pred_check
      _
    $region11: #{model_forward.1} parent=1 // pred_check_branch
      %25 = sbr.rel (0) target = $region13
    $region12: #{model_forward.1} parent=1 // pred_region
      %s27 = ssub.s32 6144, 6144
      %28 = vsyncadd [#allocation5], %s27
      %s29 = sshll.u32 [#allocation4], 4
      %s30 = int_to_ptr.vmem [resolvable:$true] %s29
      %35 = dma.hbm_to_vmem [thread:$0]  %s2, 6144, %s30, [#allocation5], 128, 128, 8
    $region13: #{model_forward.1} parent=1 // pred_fallthru
      _
    // Predicated region
    $region14: #{model_forward.1} parent=1 // pred_check
      _
    $region15: #{model_forward.1} parent=1 // pred_check_branch
      %37 = sbr.rel (0) target = $region17
    $region16: #{model_forward.1} parent=1 // pred_region
      %38 = dma.done [#allocation3], 12288
    $region17: #{model_forward.1} parent=1 // pred_fallthru
      _
    // Predicated region
    $region18: #{model_forward.1} parent=1 // pred_check
      _
    $region19: #{model_forward.1} parent=1 // pred_check_branch
      %40 = sbr.rel (0) target = $region21
    $region20: #{model_forward.1} parent=1 // pred_region
      %41 = dma.done [#allocation5], 6144
    $region21: #{model_forward.1} parent=1 // pred_fallthru
      _
    %v42 = vld [vmem:[%s0] sm:$0xff]
    %v43 = vld [vmem:[%s0 + $0x8] sm:$0xff]
    %v44 = vld [vmem:[#allocation2] sm:$0xff]
    %v45 = vld [vmem:[#allocation2 + $0x8] sm:$0xff]
    %v46 = vld [vmem:[#allocation2 + $0x10] sm:$0xff]
    %v47 = vld [vmem:[#allocation2 + $0x18] sm:$0xff]
    %v48 = vld [vmem:[#allocation2 + $0x20] sm:$0xff]
    %v49 = vld [vmem:[#allocation2 + $0x28] sm:$0xff]
    %v50 = vld [vmem:[#allocation2 + $0x30] sm:$0xff]
    %v51 = vld [vmem:[#allocation2 + $0x38] sm:$0xff]
    %v52 = vld [vmem:[#allocation2 + $0x40] sm:$0xff]
    %v53 = vld [vmem:[#allocation2 + $0x48] sm:$0xff]
    %v54 = vld [vmem:[#allocation2 + $0x50] sm:$0xff]
    %v55 = vld [vmem:[#allocation2 + $0x58] sm:$0xff]
    %v56 = vld [vmem:[#allocation2 + $0x60] sm:$0xff]
    %v57 = vld [vmem:[#allocation2 + $0x68] sm:$0xff]
    %v58 = vld [vmem:[#allocation2 + $0x70] sm:$0xff]
    %v59 = vld [vmem:[#allocation2 + $0x78] sm:$0xff]
    %v60 = vld [vmem:[#allocation2 + $0x80] sm:$0xff]
    %v61 = vld [vmem:[#allocation2 + $0x88] sm:$0xff]
    %v62 = vld [vmem:[#allocation2 + $0x90] sm:$0xff]
    %v63 = vld [vmem:[#allocation2 + $0x98] sm:$0xff]
    %v64 = vld [vmem:[#allocation2 + $0xa0] sm:$0xff]
    %v65 = vld [vmem:[#allocation2 + $0xa8] sm:$0xff]
    %v66 = vld [vmem:[#allocation2 + $0xb0] sm:$0xff]
    %v67 = vld [vmem:[#allocation2 + $0xb8] sm:$0xff]
    %v68 = vld [vmem:[#allocation2 + $0xc0] sm:$0xff]
    %v69 = vld [vmem:[#allocation2 + $0xc8] sm:$0xff]
    %v70 = vld [vmem:[#allocation2 + $0xd0] sm:$0xff]
    %v71 = vld [vmem:[#allocation2 + $0xd8] sm:$0xff]
    %v72 = vld [vmem:[#allocation2 + $0xe0] sm:$0xff]
    %v73 = vld [vmem:[#allocation2 + $0xe8] sm:$0xff]
    %v74 = vld [vmem:[#allocation2 + $0xf0] sm:$0xff]
    %v75 = vld [vmem:[#allocation2 + $0xf8] sm:$0xff]
    %v76 = vld [vmem:[#allocation2 + $0x100] sm:$0xff]
    %v77 = vld [vmem:[#allocation2 + $0x108] sm:$0xff]
    %v78 = vld [vmem:[#allocation2 + $0x110] sm:$0xff]
    %v79 = vld [vmem:[#allocation2 + $0x118] sm:$0xff]
    %v80 = vld [vmem:[#allocation2 + $0x120] sm:$0xff]
    %v81 = vld [vmem:[#allocation2 + $0x128] sm:$0xff]
    %v82 = vld [vmem:[#allocation2 + $0x130] sm:$0xff]
    %v83 = vld [vmem:[#allocation2 + $0x138] sm:$0xff]
    %v84 = vld [vmem:[#allocation2 + $0x140] sm:$0xff]
    %v85 = vld [vmem:[#allocation2 + $0x148] sm:$0xff]
    %v86 = vld [vmem:[#allocation2 + $0x150] sm:$0xff]
    %v87 = vld [vmem:[#allocation2 + $0x158] sm:$0xff]
    %v88 = vld [vmem:[#allocation2 + $0x160] sm:$0xff]
    %v89 = vld [vmem:[#allocation2 + $0x168] sm:$0xff]
    %v90 = vld [vmem:[#allocation2 + $0x170] sm:$0xff]
    %v91 = vld [vmem:[#allocation2 + $0x178] sm:$0xff]
    %v92 = vld [vmem:[#allocation2 + $0x180] sm:$0xff]
    %v93 = vld [vmem:[#allocation2 + $0x188] sm:$0xff]
    %v94 = vld [vmem:[#allocation2 + $0x190] sm:$0xff]
    %v95 = vld [vmem:[#allocation2 + $0x198] sm:$0xff]
    %v96 = vld [vmem:[#allocation2 + $0x1a0] sm:$0xff]
    %v97 = vld [vmem:[#allocation2 + $0x1a8] sm:$0xff]
    %v98 = vld [vmem:[#allocation2 + $0x1b0] sm:$0xff]
    %v99 = vld [vmem:[#allocation2 + $0x1b8] sm:$0xff]
    %v100 = vld [vmem:[#allocation2 + $0x1c0] sm:$0xff]
    %v101 = vld [vmem:[#allocation2 + $0x1c8] sm:$0xff]
    %v102 = vld [vmem:[#allocation2 + $0x1d0] sm:$0xff]
    %v103 = vld [vmem:[#allocation2 + $0x1d8] sm:$0xff]
    %v104 = vld [vmem:[#allocation2 + $0x1e0] sm:$0xff]
    %v105 = vld [vmem:[#allocation2 + $0x1e8] sm:$0xff]
    %v106 = vld [vmem:[#allocation2 + $0x1f0] sm:$0xff]
    %v107 = vld [vmem:[#allocation2 + $0x1f8] sm:$0xff]
    %v108 = vld [vmem:[#allocation2 + $0x200] sm:$0xff]
    %v109 = vld [vmem:[#allocation2 + $0x208] sm:$0xff]
    %v110 = vld [vmem:[#allocation2 + $0x210] sm:$0xff]
    %v111 = vld [vmem:[#allocation2 + $0x218] sm:$0xff]
    %v112 = vld [vmem:[#allocation2 + $0x220] sm:$0xff]
    %v113 = vld [vmem:[#allocation2 + $0x228] sm:$0xff]
    %v114 = vld [vmem:[#allocation2 + $0x230] sm:$0xff]
    %v115 = vld [vmem:[#allocation2 + $0x238] sm:$0xff]
    %v116 = vld [vmem:[#allocation2 + $0x240] sm:$0xff]
    %v117 = vld [vmem:[#allocation2 + $0x248] sm:$0xff]
    %v118 = vld [vmem:[#allocation2 + $0x250] sm:$0xff]
    %v119 = vld [vmem:[#allocation2 + $0x258] sm:$0xff]
    %v120 = vld [vmem:[#allocation2 + $0x260] sm:$0xff]
    %v121 = vld [vmem:[#allocation2 + $0x268] sm:$0xff]
    %v122 = vld [vmem:[#allocation2 + $0x270] sm:$0xff]
    %v123 = vld [vmem:[#allocation2 + $0x278] sm:$0xff]
    %v124 = vld [vmem:[#allocation2 + $0x280] sm:$0xff]
    %v125 = vld [vmem:[#allocation2 + $0x288] sm:$0xff]
    %v126 = vld [vmem:[#allocation2 + $0x290] sm:$0xff]
    %v127 = vld [vmem:[#allocation2 + $0x298] sm:$0xff]
    %v128 = vld [vmem:[#allocation2 + $0x2a0] sm:$0xff]
    %v129 = vld [vmem:[#allocation2 + $0x2a8] sm:$0xff]
    %v130 = vld [vmem:[#allocation2 + $0x2b0] sm:$0xff]
    %v131 = vld [vmem:[#allocation2 + $0x2b8] sm:$0xff]
    %v132 = vld [vmem:[#allocation2 + $0x2c0] sm:$0xff]
    %v133 = vld [vmem:[#allocation2 + $0x2c8] sm:$0xff]
    %v134 = vld [vmem:[#allocation2 + $0x2d0] sm:$0xff]
    %v135 = vld [vmem:[#allocation2 + $0x2d8] sm:$0xff]
    %v136 = vld [vmem:[#allocation2 + $0x2e0] sm:$0xff]
    %v137 = vld [vmem:[#allocation2 + $0x2e8] sm:$0xff]
    %v138 = vld [vmem:[#allocation2 + $0x2f0] sm:$0xff]
    %v139 = vld [vmem:[#allocation2 + $0x2f8] sm:$0xff]
    %140 = vmatprep.subr.mxu0 %v45
    %141 = vmatpush1.msra.mxu0 %v44
    %142 = vmatprep.subr.mxu0 %v48
    %143 = vmatpush1.msra.mxu0 %v47
    %144 = vmatprep.subr.mxu0 %v51
    %145 = vmatpush1.msra.mxu0 %v50
    %146 = vmatprep.subr.mxu0 %v54
    %147 = vmatpush1.msra.mxu0 %v53
    %148 = vmatprep.subr.mxu0 %v57
    %149 = vmatpush1.msra.mxu0 %v56
    %150 = vmatprep.subr.mxu0 %v60
    %151 = vmatpush1.msra.mxu0 %v59
    %152 = vmatprep.subr.mxu0 %v63
    %153 = vmatpush1.msra.mxu0 %v62
    %154 = vmatprep.subr.mxu0 %v66
    %155 = vmatpush1.msra.mxu0 %v65
    %156 = vmatprep.subr.mxu0 %v69
    %157 = vmatpush1.msra.mxu0 %v68
    %158 = vmatprep.subr.mxu0 %v72
    %159 = vmatpush1.msra.mxu0 %v71
    %160 = vmatprep.subr.mxu0 %v75
    %161 = vmatpush1.msra.mxu0 %v74
    %162 = vmatprep.subr.mxu0 %v78
    %163 = vmatpush1.msra.mxu0 %v77
    %164 = vmatprep.subr.mxu0 %v81
    %165 = vmatpush1.msra.mxu0 %v80
    %166 = vmatprep.subr.mxu0 %v84
    %167 = vmatpush1.msra.mxu0 %v83
    %168 = vmatprep.subr.mxu0 %v87
    %169 = vmatpush1.msra.mxu0 %v86
    %170 = vmatprep.subr.mxu0 %v90
    %171 = vmatpush1.msra.mxu0 %v89
    %172 = vmatprep.subr.mxu0 %v93
    %173 = vmatpush1.msra.mxu0 %v92
    %174 = vmatprep.subr.mxu0 %v96
    %175 = vmatpush1.msra.mxu0 %v95
    %176 = vmatprep.subr.mxu0 %v99
    %177 = vmatpush1.msra.mxu0 %v98
    %178 = vmatprep.subr.mxu0 %v102
    %179 = vmatpush1.msra.mxu0 %v101
    %180 = vmatprep.subr.mxu0 %v105
    %181 = vmatpush1.msra.mxu0 %v104
    %182 = vmatprep.subr.mxu0 %v108
    %183 = vmatpush1.msra.mxu0 %v107
    %184 = vmatprep.subr.mxu0 %v111
    %185 = vmatpush1.msra.mxu0 %v110
    %186 = vmatprep.subr.mxu0 %v114
    %187 = vmatpush1.msra.mxu0 %v113
    %188 = vmatprep.subr.mxu0 %v117
    %189 = vmatpush1.msra.mxu0 %v116
    %190 = vmatprep.subr.mxu0 %v120
    %191 = vmatpush1.msra.mxu0 %v119
    %192 = vmatprep.subr.mxu0 %v123
    %193 = vmatpush1.msra.mxu0 %v122
    %194 = vmatprep.subr.mxu0 %v126
    %195 = vmatpush1.msra.mxu0 %v125
    %196 = vmatprep.subr.mxu0 %v129
    %197 = vmatpush1.msra.mxu0 %v128
    %198 = vmatprep.subr.mxu0 %v132
    %199 = vmatpush1.msra.mxu0 %v131
    %200 = vmatprep.subr.mxu0 %v135
    %201 = vmatpush1.msra.mxu0 %v134
    %202 = vmatprep.subr.mxu0 %v138
    %203 = vmatpush1.msra.mxu0 %v137
    %204 = vmatprep.mubr.f32.mxu0 %v43
    %205 = vmatmul.mubr.f32.gmra.mrb[0].mxu0 %v42
    %v206 = vpop.f32.mrb[0].mxu0
    %v207 = vadd.f32 0.0, %v206
    %v208 = vpop.f32.mrb[0].mxu0
    %v209 = vadd.f32 0.0, %v208
    %210 = vdwg.mxu0
    %211 = vmatprep.subr.mxu0 0.0
    %212 = vmatpush1.msra.mxu0 %v46
    %213 = vmatprep.subr.mxu0 0.0
    %214 = vmatpush1.msra.mxu0 %v49
    %215 = vmatprep.subr.mxu0 0.0
    %216 = vmatpush1.msra.mxu0 %v52
    %217 = vmatprep.subr.mxu0 0.0
    %218 = vmatpush1.msra.mxu0 %v55
    %219 = vmatprep.subr.mxu0 0.0
    %220 = vmatpush1.msra.mxu0 %v58
    %221 = vmatprep.subr.mxu0 0.0
    %222 = vmatpush1.msra.mxu0 %v61
    %223 = vmatprep.subr.mxu0 0.0
    %224 = vmatpush1.msra.mxu0 %v64
    %225 = vmatprep.subr.mxu0 0.0
    %226 = vmatpush1.msra.mxu0 %v67
    %227 = vmatprep.subr.mxu0 0.0
    %228 = vmatpush1.msra.mxu0 %v70
    %229 = vmatprep.subr.mxu0 0.0
    %230 = vmatpush1.msra.mxu0 %v73
    %231 = vmatprep.subr.mxu0 0.0
    %232 = vmatpush1.msra.mxu0 %v76
    %233 = vmatprep.subr.mxu0 0.0
    %234 = vmatpush1.msra.mxu0 %v79
    %235 = vmatprep.subr.mxu0 0.0
    %236 = vmatpush1.msra.mxu0 %v82
    %237 = vmatprep.subr.mxu0 0.0
    %238 = vmatpush1.msra.mxu0 %v85
    %239 = vmatprep.subr.mxu0 0.0
    %240 = vmatpush1.msra.mxu0 %v88
    %241 = vmatprep.subr.mxu0 0.0
    %242 = vmatpush1.msra.mxu0 %v91
    %243 = vmatprep.subr.mxu0 0.0
    %244 = vmatpush1.msra.mxu0 %v94
    %245 = vmatprep.subr.mxu0 0.0
    %246 = vmatpush1.msra.mxu0 %v97
    %247 = vmatprep.subr.mxu0 0.0
    %248 = vmatpush1.msra.mxu0 %v100
    %249 = vmatprep.subr.mxu0 0.0
    %250 = vmatpush1.msra.mxu0 %v103
    %251 = vmatprep.subr.mxu0 0.0
    %252 = vmatpush1.msra.mxu0 %v106
    %253 = vmatprep.subr.mxu0 0.0
    %254 = vmatpush1.msra.mxu0 %v109
    %255 = vmatprep.subr.mxu0 0.0
    %256 = vmatpush1.msra.mxu0 %v112
    %257 = vmatprep.subr.mxu0 0.0
    %258 = vmatpush1.msra.mxu0 %v115
    %259 = vmatprep.subr.mxu0 0.0
    %260 = vmatpush1.msra.mxu0 %v118
    %261 = vmatprep.subr.mxu0 0.0
    %262 = vmatpush1.msra.mxu0 %v121
    %263 = vmatprep.subr.mxu0 0.0
    %264 = vmatpush1.msra.mxu0 %v124
    %265 = vmatprep.subr.mxu0 0.0
    %266 = vmatpush1.msra.mxu0 %v127
    %267 = vmatprep.subr.mxu0 0.0
    %268 = vmatpush1.msra.mxu0 %v130
    %269 = vmatprep.subr.mxu0 0.0
    %270 = vmatpush1.msra.mxu0 %v133
    %271 = vmatprep.subr.mxu0 0.0
    %272 = vmatpush1.msra.mxu0 %v136
    %273 = vmatprep.subr.mxu0 0.0
    %274 = vmatpush1.msra.mxu0 %v139
    %275 = vmatprep.mubr.f32.mxu0 %v43
    %276 = vmatmul.mubr.f32.gmra.mrb[0].mxu0 %v42
    %v277 = vpop.f32.mrb[0].mxu0
    %v278 = vadd.f32 0.0, %v277
    %v279 = vpop.f32.mrb[0].mxu0
    %280 = vdwg.mxu0
    %v281 = vld [vmem:[#allocation4] sm:$0xff]
    %v282 = vld [vmem:[#allocation4 + $0x8] sm:$0xff]
    %v283 = vld [vmem:[#allocation4 + $0x10] sm:$0xff]
    %v284 = vld [vmem:[#allocation4 + $0x18] sm:$0xff]
    %v285 = vld [vmem:[#allocation4 + $0x20] sm:$0xff]
    %v286 = vld [vmem:[#allocation4 + $0x28] sm:$0xff]
    %v287 = vld [vmem:[#allocation4 + $0x30] sm:$0xff]
    %v288 = vld [vmem:[#allocation4 + $0x38] sm:$0xff]
    %v289 = vld [vmem:[#allocation4 + $0x40] sm:$0xff]
    %v290 = vld [vmem:[#allocation4 + $0x48] sm:$0xff]
    %v291 = vld [vmem:[#allocation4 + $0x50] sm:$0xff]
    %v292 = vld [vmem:[#allocation4 + $0x58] sm:$0xff]
    %v293 = vld [vmem:[#allocation4 + $0x60] sm:$0xff]
    %v294 = vld [vmem:[#allocation4 + $0x68] sm:$0xff]
    %v295 = vld [vmem:[#allocation4 + $0x70] sm:$0xff]
    %v296 = vld [vmem:[#allocation4 + $0x78] sm:$0xff]
    %v297 = vld [vmem:[#allocation4 + $0x80] sm:$0xff]
    %v298 = vld [vmem:[#allocation4 + $0x88] sm:$0xff]
    %v299 = vld [vmem:[#allocation4 + $0x90] sm:$0xff]
    %v300 = vld [vmem:[#allocation4 + $0x98] sm:$0xff]
    %v301 = vld [vmem:[#allocation4 + $0xa0] sm:$0xff]
    %v302 = vld [vmem:[#allocation4 + $0xa8] sm:$0xff]
    %v303 = vld [vmem:[#allocation4 + $0xb0] sm:$0xff]
    %v304 = vld [vmem:[#allocation4 + $0xb8] sm:$0xff]
    %v305 = vld [vmem:[#allocation4 + $0xc0] sm:$0xff]
    %v306 = vld [vmem:[#allocation4 + $0xc8] sm:$0xff]
    %v307 = vld [vmem:[#allocation4 + $0xd0] sm:$0xff]
    %v308 = vld [vmem:[#allocation4 + $0xd8] sm:$0xff]
    %v309 = vld [vmem:[#allocation4 + $0xe0] sm:$0xff]
    %v310 = vld [vmem:[#allocation4 + $0xe8] sm:$0xff]
    %v311 = vld [vmem:[#allocation4 + $0xf0] sm:$0xff]
    %v312 = vld [vmem:[#allocation4 + $0xf8] sm:$0xff]
    %v313 = vld [vmem:[#allocation4 + $0x100] sm:$0xff]
    %v314 = vld [vmem:[#allocation4 + $0x108] sm:$0xff]
    %v315 = vld [vmem:[#allocation4 + $0x110] sm:$0xff]
    %v316 = vld [vmem:[#allocation4 + $0x118] sm:$0xff]
    %v317 = vld [vmem:[#allocation4 + $0x120] sm:$0xff]
    %v318 = vld [vmem:[#allocation4 + $0x128] sm:$0xff]
    %v319 = vld [vmem:[#allocation4 + $0x130] sm:$0xff]
    %v320 = vld [vmem:[#allocation4 + $0x138] sm:$0xff]
    %v321 = vld [vmem:[#allocation4 + $0x140] sm:$0xff]
    %v322 = vld [vmem:[#allocation4 + $0x148] sm:$0xff]
    %v323 = vld [vmem:[#allocation4 + $0x150] sm:$0xff]
    %v324 = vld [vmem:[#allocation4 + $0x158] sm:$0xff]
    %v325 = vld [vmem:[#allocation4 + $0x160] sm:$0xff]
    %v326 = vld [vmem:[#allocation4 + $0x168] sm:$0xff]
    %v327 = vld [vmem:[#allocation4 + $0x170] sm:$0xff]
    %v328 = vld [vmem:[#allocation4 + $0x178] sm:$0xff]
    %329 = vmatprep.subr.mxu0 0.0
    %330 = vmatpush1.msra.mxu0 %v281
    %331 = vmatprep.subr.mxu0 0.0
    %332 = vmatpush1.msra.mxu0 %v282
    %333 = vmatprep.subr.mxu0 0.0
    %334 = vmatpush1.msra.mxu0 %v283
    %335 = vmatprep.subr.mxu0 0.0
    %336 = vmatpush1.msra.mxu0 %v284
    %337 = vmatprep.subr.mxu0 0.0
    %338 = vmatpush1.msra.mxu0 %v285
    %339 = vmatprep.subr.mxu0 0.0
    %340 = vmatpush1.msra.mxu0 %v286
    %341 = vmatprep.subr.mxu0 0.0
    %342 = vmatpush1.msra.mxu0 %v287
    %343 = vmatprep.subr.mxu0 0.0
    %344 = vmatpush1.msra.mxu0 %v288
    %345 = vmatprep.subr.mxu0 0.0
    %346 = vmatpush1.msra.mxu0 %v289
    %347 = vmatprep.subr.mxu0 0.0
    %348 = vmatpush1.msra.mxu0 %v290
    %349 = vmatprep.subr.mxu0 0.0
    %350 = vmatpush1.msra.mxu0 %v291
    %351 = vmatprep.subr.mxu0 0.0
    %352 = vmatpush1.msra.mxu0 %v292
    %353 = vmatprep.subr.mxu0 0.0
    %354 = vmatpush1.msra.mxu0 %v293
    %355 = vmatprep.subr.mxu0 0.0
    %356 = vmatpush1.msra.mxu0 %v294
    %357 = vmatprep.subr.mxu0 0.0
    %358 = vmatpush1.msra.mxu0 %v295
    %359 = vmatprep.subr.mxu0 0.0
    %360 = vmatpush1.msra.mxu0 %v296
    %361 = vmatprep.subr.mxu0 0.0
    %362 = vmatpush1.msra.mxu0 %v297
    %363 = vmatprep.subr.mxu0 0.0
    %364 = vmatpush1.msra.mxu0 %v298
    %365 = vmatprep.subr.mxu0 0.0
    %366 = vmatpush1.msra.mxu0 %v299
    %367 = vmatprep.subr.mxu0 0.0
    %368 = vmatpush1.msra.mxu0 %v300
    %369 = vmatprep.subr.mxu0 0.0
    %370 = vmatpush1.msra.mxu0 %v301
    %371 = vmatprep.subr.mxu0 0.0
    %372 = vmatpush1.msra.mxu0 %v302
    %373 = vmatprep.subr.mxu0 0.0
    %374 = vmatpush1.msra.mxu0 %v303
    %375 = vmatprep.subr.mxu0 0.0
    %376 = vmatpush1.msra.mxu0 %v304
    %377 = vmatprep.subr.mxu0 0.0
    %378 = vmatpush1.msra.mxu0 %v305
    %379 = vmatprep.subr.mxu0 0.0
    %380 = vmatpush1.msra.mxu0 %v306
    %381 = vmatprep.subr.mxu0 0.0
    %382 = vmatpush1.msra.mxu0 %v307
    %383 = vmatprep.subr.mxu0 0.0
    %384 = vmatpush1.msra.mxu0 %v308
    %385 = vmatprep.subr.mxu0 0.0
    %386 = vmatpush1.msra.mxu0 %v309
    %387 = vmatprep.subr.mxu0 0.0
    %388 = vmatpush1.msra.mxu0 %v310
    %389 = vmatprep.subr.mxu0 0.0
    %390 = vmatpush1.msra.mxu0 %v311
    %391 = vmatprep.subr.mxu0 0.0
    %392 = vmatpush1.msra.mxu0 %v312
    %393 = vmatprep.mubr.f32.mxu0 %v209
    %394 = vmatmul.mubr.f32.gmra.mrb[0].mxu0 %v207
    %v395 = vpop.f32.mrb[0].mxu0
    %v396 = vadd.f32 0.0, %v395
    %v397 = vpop.f32.mrb[0].mxu0
    %398 = vdwg.mxu0
    %399 = vmatprep.subr.mxu0 0.0
    %400 = vmatpush1.msra.mxu0 %v313
    %401 = vmatprep.subr.mxu0 0.0
    %402 = vmatpush1.msra.mxu0 %v314
    %403 = vmatprep.subr.mxu0 0.0
    %404 = vmatpush1.msra.mxu0 %v315
    %405 = vmatprep.subr.mxu0 0.0
    %406 = vmatpush1.msra.mxu0 %v316
    %407 = vmatprep.subr.mxu0 0.0
    %408 = vmatpush1.msra.mxu0 %v317
    %409 = vmatprep.subr.mxu0 0.0
    %410 = vmatpush1.msra.mxu0 %v318
    %411 = vmatprep.subr.mxu0 0.0
    %412 = vmatpush1.msra.mxu0 %v319
    %413 = vmatprep.subr.mxu0 0.0
    %414 = vmatpush1.msra.mxu0 %v320
    %415 = vmatprep.subr.mxu0 0.0
    %416 = vmatpush1.msra.mxu0 %v321
    %417 = vmatprep.subr.mxu0 0.0
    %418 = vmatpush1.msra.mxu0 %v322
    %419 = vmatprep.subr.mxu0 0.0
    %420 = vmatpush1.msra.mxu0 %v323
    %421 = vmatprep.subr.mxu0 0.0
    %422 = vmatpush1.msra.mxu0 %v324
    %423 = vmatprep.subr.mxu0 0.0
    %424 = vmatpush1.msra.mxu0 %v325
    %425 = vmatprep.subr.mxu0 0.0
    %426 = vmatpush1.msra.mxu0 %v326
    %427 = vmatprep.subr.mxu0 0.0
    %428 = vmatpush1.msra.mxu0 %v327
    %429 = vmatprep.subr.mxu0 0.0
    %430 = vmatpush1.msra.mxu0 %v328
    %431 = vmatprep.subr.mxu0 0.0
    %432 = vmatpush1.msra.mxu0 0.0
    %433 = vmatprep.subr.mxu0 0.0
    %434 = vmatpush1.msra.mxu0 0.0
    %435 = vmatprep.subr.mxu0 0.0
    %436 = vmatpush1.msra.mxu0 0.0
    %437 = vmatprep.subr.mxu0 0.0
    %438 = vmatpush1.msra.mxu0 0.0
    %439 = vmatprep.subr.mxu0 0.0
    %440 = vmatpush1.msra.mxu0 0.0
    %441 = vmatprep.subr.mxu0 0.0
    %442 = vmatpush1.msra.mxu0 0.0
    %443 = vmatprep.subr.mxu0 0.0
    %444 = vmatpush1.msra.mxu0 0.0
    %445 = vmatprep.subr.mxu0 0.0
    %446 = vmatpush1.msra.mxu0 0.0
    %447 = vmatprep.subr.mxu0 0.0
    %448 = vmatpush1.msra.mxu0 0.0
    %449 = vmatprep.subr.mxu0 0.0
    %450 = vmatpush1.msra.mxu0 0.0
    %451 = vmatprep.subr.mxu0 0.0
    %452 = vmatpush1.msra.mxu0 0.0
    %453 = vmatprep.subr.mxu0 0.0
    %454 = vmatpush1.msra.mxu0 0.0
    %455 = vmatprep.subr.mxu0 0.0
    %456 = vmatpush1.msra.mxu0 0.0
    %457 = vmatprep.subr.mxu0 0.0
    %458 = vmatpush1.msra.mxu0 0.0
    %459 = vmatprep.subr.mxu0 0.0
    %460 = vmatpush1.msra.mxu0 0.0
    %461 = vmatprep.subr.mxu0 0.0
    %462 = vmatpush1.msra.mxu0 0.0
    %463 = vmatprep.mubr.f32.mxu0 0.0
    %464 = vmatmul.mubr.f32.gmra.mrb[0].mxu0 %v278
    %v465 = vpop.f32.mrb[0].mxu0
    %v466 = vadd.f32 %v396, %v465
    %v467 = vpop.f32.mrb[0].mxu0
    %468 = vdwg.mxu0
    %v469 = vxor.u32 %v466, 2147483648
    %v470 = vmul.f32 %v469, 1.442695
    %v471 = vpow.pop %v470
    %v472 = vadd.f32 %v471, 1.0
    %v473 = vrcp.pop %v472
    %v474 = vmul.f32 1.0, %v473
    %475 = vst [vmem:[%s3] sm:$0xff] %v474
    // Predicated region
    $region22: #{model_forward.1} parent=1 // pred_check
      _
    $region23: #{model_forward.1} parent=1 // pred_check_branch
      %477 = sbr.rel (0) target = $region25
    $region24: #{model_forward.1} parent=1 // pred_region
      _
    $region25: #{model_forward.1} parent=1 // pred_fallthru
      _
    // Predicated region
    $region26: #{model_forward.1} parent=1 // pred_check
      _
    $region27: #{model_forward.1} parent=1 // pred_check_branch
      %479 = sbr.rel (0) target = $region29
    $region28: #{model_forward.1} parent=1 // pred_region
      _
    $region29: #{model_forward.1} parent=1 // pred_fallthru
      _
    %480 = vsyncpa [#allocation3], 1
    %481 = vsyncpa [#allocation5], 1

</llo_original>
